<compile_context>
chip_gen: v7x
topology: tpu7x:2x2x1
jax: 0.10.0
libtpu: 0.0.40
codegen_flags: <defaults>
</compile_context>

<pallas_src>
import numpy as np
import jax
import jax.numpy as jnp
from jax.experimental import pallas as pl
from jax.experimental.pallas import tpu as pltpu


_LANE = 128
# Keep the kernel's VMEM footprint comfortably under the smallest scoped
# default (v5e: 16 MiB, v7x: 32 MiB of 64 MiB physical).
_VMEM_BUDGET_BYTES = 12 * 1024 * 1024


def _pick_hw_tile(hw_pad, channels):
    """Largest 128-multiple tile dividing hw_pad that fits the VMEM budget."""
    # Per pixel-column bytes: 2x f32 output double-buffer (8) + f32 sin slab (4)
    # + bf16 copy of the slab (2), all of height `channels`.
    bytes_per_col = max(channels, 8) * (2 * 4 + 4 + 2)
    cap = (_VMEM_BUDGET_BYTES // bytes_per_col) // _LANE * _LANE
    cap = int(max(_LANE, min(cap, 2048)))
    t = min(hw_pad, cap)
    t -= t % _LANE
    t = max(t, _LANE)
    while t > _LANE and hw_pad % t != 0:
        t -= _LANE
    return t


def synthesis_input_forward(w, params, *, size, sampling_rate, bandwidth):
    """Matches SynthesisInput.forward. w: [B, w_dim] f32 -> [B, C, H, W] f32."""
    freqs = params["freqs"]          # [C, 2]
    phases = params["phases"]        # [C]
    weight = params["weight"]        # [C, C]
    affine_w = params["affine_w"]    # [4, w_dim]
    affine_b = params["affine_b"]    # [4]
    transform = params["transform"]  # [3, 3]

    B, w_dim = w.shape
    C = freqs.shape[0]
    W_size, H_size = int(size[0]), int(size[1])
    HW = H_size * W_size

    # ---------------- plain-JAX glue: tiny O(B*C) preamble -------------------
    weight_gain = 1.0 / np.sqrt(w_dim)
    t = w @ (affine_w * weight_gain).T + affine_b                      # [B, 4]
    t = t / jnp.linalg.norm(t[:, :2], axis=1, keepdims=True)

    eye3 = jnp.eye(3, dtype=jnp.float32)
    m_r = jnp.tile(eye3[None], (B, 1, 1))
    m_r = (m_r.at[:, 0, 0].set(t[:, 0])
              .at[:, 0, 1].set(-t[:, 1])
              .at[:, 1, 0].set(t[:, 1])
              .at[:, 1, 1].set(t[:, 0]))
    m_t = jnp.tile(eye3[None], (B, 1, 1))
    m_t = m_t.at[:, 0, 2].set(-t[:, 2]).at[:, 1, 2].set(-t[:, 3])
    transforms = m_r @ m_t @ transform[None]                           # [B, 3, 3]

    phases_b = phases[None] + (freqs[None] @ transforms[:, :2, 2:])[..., 0]   # [B, C]
    freqs_b = freqs[None] @ transforms[:, :2, :2]                             # [B, C, 2]
    amps_b = jnp.clip(
        1.0 - (jnp.linalg.norm(freqs_b, axis=2) - bandwidth)
        / (sampling_rate / 2.0 - bandwidth),
        0.0, 1.0)                                                             # [B, C]

    two_pi = 2.0 * np.pi
    # Packed per-batch operand, channels on sublanes:
    #   cols = (2pi*fx, 2pi*fy, 2pi*phase, amplitude)
    fp = jnp.concatenate(
        [two_pi * freqs_b, (two_pi * phases_b)[..., None], amps_b[..., None]],
        axis=-1).astype(jnp.float32)                                          # [B, C, 4]

    # Batch-invariant channel-mix weight, bf16 for the MXU fast path.
    w_mix = (weight / np.sqrt(C)).astype(jnp.bfloat16)                        # [C, C]

    # F.affine_grid(align_corners=False) coordinates are affine in pixel index:
    #   gx(ix) = ax*ix + bx,  gy(iy) = ay*iy + by
    sx = 0.5 * W_size / sampling_rate
    sy = 0.5 * H_size / sampling_rate
    ax = float(2.0 * sx / W_size)
    bx = float(sx / W_size - sx)
    ay = float(2.0 * sy / H_size)
    by = float(sy / H_size - sy)

    # Pad the pixel axis to a multiple of 128 so every output block is
    # lane-dense and VMEM use is independent of the resolution.
    hw_pad = int(pl.cdiv(HW, _LANE)) * _LANE
    tile_hw = _pick_hw_tile(hw_pad, C)
    num_tiles = hw_pad // tile_hw
    # v7x has 2 TensorCores sharing the grid: make sure there are >= 2 steps.
    if B * num_tiles < 2 and hw_pad >= 2 * _LANE:
        t_half = (hw_pad // 2) // _LANE * _LANE
        while t_half > _LANE and hw_pad % t_half != 0:
            t_half -= _LANE
        tile_hw = max(t_half, _LANE)
        num_tiles = hw_pad // tile_hw

    w_pow2 = (W_size & (W_size - 1)) == 0
    log2_w = int(np.log2(W_size)) if w_pow2 else 0
    c_chunk = C if C <= 256 else 256

    # ---------------- Pallas hot path: O(B*HW*C + B*HW*C^2) ------------------
    def kernel(fp_ref, wmix_ref, out_ref):
        t_idx = pl.program_id(1)
        # Global pixel index for this tile, pixels on the lane axis.
        p = jax.lax.broadcasted_iota(jnp.int32, (1, tile_hw), 1) + t_idx * tile_hw
        if w_pow2:
            iy = p >> log2_w
            ix = p & (W_size - 1)
        else:
            iy = p // W_size
            ix = p - iy * W_size
        gx = ix.astype(jnp.float32) * ax + bx                    # [1, T]
        gy = iy.astype(jnp.float32) * ay + by                    # [1, T]

        fp_v = fp_ref[0]                                         # [C, 4]
        acc = None
        for c0 in range(0, C, c_chunk):                          # static, hoisted gx/gy
            c1 = min(c0 + c_chunk, C)
            fx = fp_v[c0:c1, 0:1]                                # [c, 1]
            fy = fp_v[c0:c1, 1:2]
            ph = fp_v[c0:c1, 2:3]
            am = fp_v[c0:c1, 3:4]
            feat = jnp.sin(fx * gx + fy * gy + ph) * am          # [c, T] f32 (EUP+VPU)
            part = jnp.dot(wmix_ref[:, c0:c1],                   # bf16 MXU matmul
                           feat.astype(jnp.bfloat16),
                           preferred_element_type=jnp.float32)   # [C, T] f32
            acc = part if acc is None else acc + part
        out_ref[0] = acc                                         # lane-dense store

    cost = pl.CostEstimate(
        flops=2 * B * hw_pad * C * C,
        transcendentals=B * hw_pad * C,
        bytes_accessed=B * C * hw_pad * 4 + C * C * 2 + B * C * 4 * 4)

    out = pl.pallas_call(
        kernel,
        out_shape=jax.ShapeDtypeStruct((B, C, hw_pad), jnp.float32),
        grid=(B, num_tiles),
        in_specs=[
            pl.BlockSpec((1, C, 4), lambda b, t: (b, 0, 0)),   # packed freqs/phases/amps
            pl.BlockSpec((C, C), lambda b, t: (0, 0)),         # batch-invariant bf16 weight
        ],
        out_specs=pl.BlockSpec((1, C, tile_hw), lambda b, t: (b, 0, t)),
        compiler_params=pltpu.CompilerParams(
            dimension_semantics=("parallel", "parallel"),
            vmem_limit_bytes=32 * 1024 * 1024),
        cost_estimate=cost,
    )(fp, w_mix)

    if hw_pad != HW:
        out = out[:, :, :HW]
    # [B, C, HW] -> [B, C, H, W]: contiguous reshape only, no transpose needed.
    return out.reshape(B, C, H_size, W_size)


def synthesis_input_reference(w, params, *, size, sampling_rate, bandwidth):
    """Pure-JAX reference mirroring the PyTorch SynthesisInput.forward math."""
    freqs = params["freqs"]
    phases = params["phases"]
    weight = params["weight"]
    affine_w = params["affine_w"]
    affine_b = params["affine_b"]
    transform = params["transform"]

    B, w_dim = w.shape
    C = freqs.shape[0]
    W_size, H_size = int(size[0]), int(size[1])

    t = w @ (affine_w / np.sqrt(w_dim)).T + affine_b
    t = t / jnp.linalg.norm(t[:, :2], axis=1, keepdims=True)
    eye3 = jnp.eye(3, dtype=jnp.float32)
    m_r = jnp.tile(eye3[None], (B, 1, 1))
    m_r = (m_r.at[:, 0, 0].set(t[:, 0]).at[:, 0, 1].set(-t[:, 1])
              .at[:, 1, 0].set(t[:, 1]).at[:, 1, 1].set(t[:, 0]))
    m_t = jnp.tile(eye3[None], (B, 1, 1))
    m_t = m_t.at[:, 0, 2].set(-t[:, 2]).at[:, 1, 2].set(-t[:, 3])
    transforms = m_r @ m_t @ transform[None]
    phases_b = phases[None] + (freqs[None] @ transforms[:, :2, 2:])[..., 0]
    freqs_b = freqs[None] @ transforms[:, :2, :2]
    amps_b = jnp.clip(1.0 - (jnp.linalg.norm(freqs_b, axis=2) - bandwidth)
                      / (sampling_rate / 2.0 - bandwidth), 0.0, 1.0)

    x_lin = (2.0 * np.arange(W_size) + 1.0) / W_size - 1.0
    y_lin = (2.0 * np.arange(H_size) + 1.0) / H_size - 1.0
    sx = 0.5 * W_size / sampling_rate
    sy = 0.5 * H_size / sampling_rate
    gx = np.broadcast_to((sx * x_lin)[None, :], (H_size, W_size))
    gy = np.broadcast_to((sy * y_lin)[:, None], (H_size, W_size))
    grid = jnp.asarray(np.stack([gx, gy], axis=-1), dtype=jnp.float32)   # [H, W, 2]

    x = jnp.einsum("hwd,bcd->bhwc", grid, freqs_b) + phases_b[:, None, None, :]
    x = jnp.sin(x * (2.0 * np.pi)) * amps_b[:, None, None, :]
    x = x @ (weight / np.sqrt(C)).T
    return x.transpose(0, 3, 1, 2)


def init_params(key, *, w_dim, channels, bandwidth):
    """Deterministic parameter init mirroring SynthesisInput.__init__."""
    k_freqs, k_phases, k_weight = jax.random.split(key, 3)

    freqs = jax.random.normal(k_freqs, (channels, 2), dtype=jnp.float32)
    radii = jnp.sqrt(jnp.sum(freqs ** 2, axis=1, keepdims=True))
    freqs = freqs / (radii * jnp.exp(radii ** 2) ** 0.25)
    freqs = freqs * bandwidth

    phases = jax.random.uniform(k_phases, (channels,), dtype=jnp.float32) - 0.5
    weight = jax.random.normal(k_weight, (channels, channels), dtype=jnp.float32)

    # FullyConnectedLayer(w_dim, 4, weight_init=0, bias_init=[1,0,0,0])
    affine_w = jnp.zeros((4, w_dim), dtype=jnp.float32)
    affine_b = jnp.array([1.0, 0.0, 0.0, 0.0], dtype=jnp.float32)

    transform = jnp.eye(3, dtype=jnp.float32)

    return dict(freqs=freqs, phases=phases, weight=weight,
                affine_w=affine_w, affine_b=affine_b, transform=transform)


if __name__ == "__main__":
    # Small, module-consistent shapes.
    w_dim = 32
    channels = 16
    size = (16, 16)          # (width, height)
    sampling_rate = 16
    bandwidth = 2
    batch = 2

    key = jax.random.PRNGKey(0)
    k_params, k_w = jax.random.split(key)
    params = init_params(k_params, w_dim=w_dim, channels=channels,
                         bandwidth=bandwidth)
    w = jax.random.normal(k_w, (batch, w_dim), dtype=jnp.float32)

    fwd = jax.jit(lambda w_: synthesis_input_forward(
        w_, params, size=size, sampling_rate=sampling_rate, bandwidth=bandwidth))
    out = jax.block_until_ready(fwd(w))

    assert out.shape == (batch, channels, size[1], size[0]), out.shape
    assert out.dtype == jnp.float32

    ref = jax.block_until_ready(synthesis_input_reference(
        w, params, size=size, sampling_rate=sampling_rate, bandwidth=bandwidth))
    err = float(np.max(np.abs(np.asarray(out) - np.asarray(ref))))
    assert np.allclose(np.asarray(out), np.asarray(ref), rtol=2e-2, atol=2e-2), err

    print("KERNEL_OK")
</pallas_src>

<mosaic_0001>
module attributes {stable_mosaic.version = 11 : i64} {
  func.func @kernel(%arg0: i32, %arg1: i32, %arg2: memref<1x16x4xf32, #tpu.memory_space<vmem>>, %arg3: memref<16x16xbf16, #tpu.memory_space<vmem>>, %arg4: memref<1x16x256xf32, #tpu.memory_space<vmem>>) attributes {dimension_semantics = [#tpu.dimension_semantics<parallel>, #tpu.dimension_semantics<parallel>], iteration_bounds = array<i64: 2, 1>, scalar_prefetch = 0 : i64, scratch_operands = 0 : i64, tpu.core_type = #tpu.core_type<tc>, window_params = [{transform_indices = @transform_0, window_bounds = array<i64: 1, 16, 4>}, {pipeline_mode = #tpu.pipeline_mode<synchronous>, transform_indices = @transform_1, window_bounds = array<i64: 16, 16>}, {transform_indices = @transform_2, window_bounds = array<i64: 1, 16, 256>}]} {
    %0 = tpu.iota {dimensions = array<i32: 1>} : vector<1x256xi32>
    %c256_i32 = arith.constant 256 : i32
    %1 = arith.muli %arg1, %c256_i32 : i32
    %2 = vector.broadcast %1 : i32 to vector<1x256xi32>
    %3 = arith.addi %0, %2 : vector<1x256xi32>
    %c4_i32 = arith.constant 4 : i32
    %4 = vector.broadcast %c4_i32 : i32 to vector<1x256xi32>
    %5 = arith.shrsi %3, %4 : vector<1x256xi32>
    %c15_i32 = arith.constant 15 : i32
    %6 = vector.broadcast %c15_i32 : i32 to vector<1x256xi32>
    %7 = arith.andi %3, %6 : vector<1x256xi32>
    %8 = arith.sitofp %7 : vector<1x256xi32> to vector<1x256xf32>
    %cst = arith.constant 6.250000e-02 : f32
    %9 = vector.broadcast %cst : f32 to vector<1x256xf32>
    %10 = arith.mulf %8, %9 : vector<1x256xf32>
    %cst_0 = arith.constant -4.687500e-01 : f32
    %11 = vector.broadcast %cst_0 : f32 to vector<1x256xf32>
    %12 = arith.addf %10, %11 : vector<1x256xf32>
    %13 = arith.sitofp %5 : vector<1x256xi32> to vector<1x256xf32>
    %cst_1 = arith.constant 6.250000e-02 : f32
    %14 = vector.broadcast %cst_1 : f32 to vector<1x256xf32>
    %15 = arith.mulf %13, %14 : vector<1x256xf32>
    %cst_2 = arith.constant -4.687500e-01 : f32
    %16 = vector.broadcast %cst_2 : f32 to vector<1x256xf32>
    %17 = arith.addf %15, %16 : vector<1x256xf32>
    %c0 = arith.constant 0 : index
    %c0_3 = arith.constant 0 : index
    %c0_4 = arith.constant 0 : index
    %18 = vector.load %arg2[%c0, %c0_3, %c0_4] : memref<1x16x4xf32, #tpu.memory_space<vmem>>, vector<1x16x4xf32>
    %19 = vector.shape_cast %18 : vector<1x16x4xf32> to vector<16x4xf32>
    %20 = vector.extract_strided_slice %19 {offsets = [0, 0], sizes = [16, 1], strides = [1, 1]} : vector<16x4xf32> to vector<16x1xf32>
    %21 = vector.extract_strided_slice %19 {offsets = [0, 1], sizes = [16, 1], strides = [1, 1]} : vector<16x4xf32> to vector<16x1xf32>
    %22 = vector.extract_strided_slice %19 {offsets = [0, 2], sizes = [16, 1], strides = [1, 1]} : vector<16x4xf32> to vector<16x1xf32>
    %23 = vector.extract_strided_slice %19 {offsets = [0, 3], sizes = [16, 1], strides = [1, 1]} : vector<16x4xf32> to vector<16x1xf32>
    %24 = vector.broadcast %20 : vector<16x1xf32> to vector<16x256xf32>
    %25 = vector.broadcast %12 : vector<1x256xf32> to vector<16x256xf32>
    %26 = arith.mulf %24, %25 : vector<16x256xf32>
    %27 = vector.broadcast %21 : vector<16x1xf32> to vector<16x256xf32>
    %28 = vector.broadcast %17 : vector<1x256xf32> to vector<16x256xf32>
    %29 = arith.mulf %27, %28 : vector<16x256xf32>
    %30 = arith.addf %26, %29 : vector<16x256xf32>
    %31 = vector.broadcast %22 : vector<16x1xf32> to vector<16x256xf32>
    %32 = arith.addf %30, %31 : vector<16x256xf32>
    %33 = math.sin %32 : vector<16x256xf32>
    %34 = vector.broadcast %23 : vector<16x1xf32> to vector<16x256xf32>
    %35 = arith.mulf %33, %34 : vector<16x256xf32>
    %c0_5 = arith.constant 0 : index
    %c0_6 = arith.constant 0 : index
    %36 = vector.load %arg3[%c0_5, %c0_6] : memref<16x16xbf16, #tpu.memory_space<vmem>>, vector<16x16xbf16>
    %37 = arith.truncf %35 : vector<16x256xf32> to vector<16x256xbf16>
    %cst_7 = arith.constant dense<0.000000e+00> : vector<16x256xf32>
    %38 = tpu.matmul %36, %37, %cst_7 {dimension_numbers = #tpu.dot_dimension_numbers<[1], [0], [0], [1], [0, 0, 1, 1], [], []>} : vector<16x16xbf16>, vector<16x256xbf16>, vector<16x256xf32> -> vector<16x256xf32>
    %c0_8 = arith.constant 0 : index
    %c0_9 = arith.constant 0 : index
    %c0_10 = arith.constant 0 : index
    %39 = vector.load %arg4[%c0_8, %c0_9, %c0_10] : memref<1x16x256xf32, #tpu.memory_space<vmem>>, vector<1x16x256xf32>
    %40 = vector.shape_cast %39 : vector<1x16x256xf32> to vector<16x256xf32>
    %41 = vector.shape_cast %38 : vector<16x256xf32> to vector<1x16x256xf32>
    tpu.vector_store %arg4[%c0_8, %c0_9, %c0_10], %41 {strides = array<i32>} : memref<1x16x256xf32, #tpu.memory_space<vmem>>, vector<1x16x256xf32>,
    return
  }
  func.func @transform_0(%arg0: i32, %arg1: i32) -> (i32, i32, i32) {
    %c0_i32 = arith.constant 0 : i32
    %c0_i32_0 = arith.constant 0 : i32
    %c0_i32_1 = arith.constant 0 : i32
    return %arg0, %c0_i32, %c0_i32_0 : i32, i32, i32
  }
  func.func @transform_1(%arg0: i32, %arg1: i32) -> (i32, i32) {
    %c0_i32 = arith.constant 0 : i32
    %c0_i32_0 = arith.constant 0 : i32
    %c0_i32_1 = arith.constant 0 : i32
    return %c0_i32, %c0_i32_0 : i32, i32
  }
  func.func @transform_2(%arg0: i32, %arg1: i32) -> (i32, i32, i32) {
    %c0_i32 = arith.constant 0 : i32
    %c0_i32_0 = arith.constant 0 : i32
    return %arg0, %c0_i32, %arg1 : i32, i32, i32
  }
}

</mosaic_0001>

<llo_original>
// kernel: _lambda_.1
$region0: #{_lambda_.1}
  #allocation0 [shape = 'u32[]', space=smem, size = 0x4, offset = 0x4, fixed_abs, tag = 'smem constant byte address 0x4 - core index']
  #allocation1 [shape = 'u32[144,128]{1,0:T(1,128)}', space=vmem, size = 0x12000, scoped, tag = 'internal scratch']
  %s0 = inlined_call_operand.vmem [shape: f32[2,16,4], index: 0, kind: input, shape index: {}]
  %s1 = inlined_call_operand.vmem [shape: bf16[16,16], index: 1, kind: input, shape index: {}]
  %s2 = inlined_call_operand.vmem [shape: f32[2,16,256], index: 2, kind: output, shape index: {}]
  %s3 = sld [smem:[#allocation0]]
  $region41: #{_lambda_.1} parent=0
    _
  %s5 = ssub.s32 1, %s3
  %s6 = scalar_select 0, %s5, %s3
  loop: start=0, step=1, limit=4
  $region2: #{_lambda_.1} parent=0 // loop_pre_header
    _
  $region3: #{_lambda_.1} parent=0 // loop_header
    %s8 = sphi 0, %s12
    %p9 = scmp.ge.s32.totalorder %s8, 4
    %s15 = sphi 0, %s27
    %s16 = sphi 0, %s23
    %s17 = sphi 0, %s15
    %s18 = sphi 0, %s16
    %s19 = sphi 0, %s17
    %s20 = sphi 0, %s18
    %s30 = sphi 0, %s32
    %s33 = sphi 0, %s30
    %s34 = sphi 0, %s33
    %s50 = sphi 0, %s34
    %s54 = sphi 0, %s54
    %s56 = sphi 0, %s54
    %s57 = sphi 0, %s56
    %s71 = sphi 0, %s57
    %s79 = sphi 0, %s81
    %s82 = sphi 0, %s79
    %s83 = sphi 0, %s82
    %s99 = sphi 0, %s83
  $region4: #{_lambda_.1} parent=0 // loop_header_branch
    %11 = sbr.rel (%p9) target = $region8
  $region5: #{_lambda_.1} parent=0 // loop_body
    %s13 = ssub.s32 %s8, 1
    %s14 = ssub.s32 %s8, 2
    %s21 = sadd.s32 1, %s16
    %p22 = scmp.ge.s32.totalorder %s21, 1
    %s23 = scalar_select %p22, 0, %s21
    %s24 = sadd.s32 1, %s15
    %s25 = scalar_select %p22, %s24, %s15
    %p26 = scmp.ge.s32.totalorder %s25, 2
    %s27 = scalar_select %p26, 0, %s25
    %s28 = ssub.s32 %s15, %s27
    %p29 = scmp.eq.s32.totalorder %s28, 0
    %s31 = sadd.s32 %s30, 1
    %s32 = scalar_select %p29, %s30, %s31
    %p35 = pneg %p29
    %p36 = scmp.eq.s32.totalorder %s8, 1
    %p37 = por %p35, %p36
    %p38 = scmp.ne.s32.totalorder %s30, %s33
    %p39 = scmp.eq.s32.totalorder %s8, 0
    %p40 = por %p38, %p39
    %p41 = scmp.ne.s32.totalorder %s30, %s33
    %p42 = scmp.eq.s32.totalorder %s13, 1
    %p43 = por %p41, %p42
    %p44 = scmp.ne.s32.totalorder %s33, %s34
    %p45 = scmp.eq.s32.totalorder %s13, 0
    %p46 = por %p44, %p45
    %p47 = scmp.ne.s32.totalorder %s33, %s34
    %p48 = scmp.eq.s32.totalorder %s14, 1
    %p49 = por %p47, %p48
    %p51 = scmp.ne.s32.totalorder %s34, %s50
    %p52 = scmp.eq.s32.totalorder %s14, 0
    %p53 = por %p51, %p52
    %s55 = sadd.s32 %s54, 1
    %p58 = scmp.eq.s32.totalorder %s8, 1
    %p59 = scmp.ne.s32.totalorder %s54, %s56
    %p60 = scmp.eq.s32.totalorder %s8, 0
    %p61 = por %p59, %p60
    %p62 = scmp.ne.s32.totalorder %s54, %s56
    %p63 = scmp.eq.s32.totalorder %s13, 1
    %p64 = por %p62, %p63
    %p65 = scmp.ne.s32.totalorder %s56, %s57
    %p66 = scmp.eq.s32.totalorder %s13, 0
    %p67 = por %p65, %p66
    %p68 = scmp.ne.s32.totalorder %s56, %s57
    %p69 = scmp.eq.s32.totalorder %s14, 1
    %p70 = por %p68, %p69
    %p72 = scmp.ne.s32.totalorder %s57, %s71
    %p73 = scmp.eq.s32.totalorder %s14, 0
    %p74 = por %p72, %p73
    %s75 = ssub.s32 %s15, %s27
    %s76 = ssub.s32 %s16, %s23
    %s77 = sor.u32 %s75, %s76
    %p78 = scmp.eq.s32.totalorder %s77, 0
    %s80 = sadd.s32 %s79, 1
    %s81 = scalar_select %p78, %s79, %s80
    %p84 = pneg %p78
    %p85 = scmp.eq.s32.totalorder %s8, 1
    %p86 = por %p84, %p85
    %p87 = scmp.ne.s32.totalorder %s79, %s82
    %p88 = scmp.eq.s32.totalorder %s8, 0
    %p89 = por %p87, %p88
    %p90 = scmp.ne.s32.totalorder %s79, %s82
    %p91 = scmp.eq.s32.totalorder %s13, 1
    %p92 = por %p90, %p91
    %p93 = scmp.ne.s32.totalorder %s82, %s83
    %p94 = scmp.eq.s32.totalorder %s13, 0
    %p95 = por %p93, %p94
    %p96 = scmp.ne.s32.totalorder %s82, %s83
    %p97 = scmp.eq.s32.totalorder %s14, 1
    %p98 = por %p96, %p97
    %p100 = scmp.ne.s32.totalorder %s83, %s99
    %p101 = scmp.eq.s32.totalorder %s14, 0
    %p102 = por %p100, %p101
    %p103 = scmp.le.s32.totalorder 1, %s8
    %p104 = scmp.lt.s32.totalorder %s8, 3
    %p105 = pnand %p103, %p104
    %p106 = pneg %p105
    // Predicated region
    $region9: #{_lambda_.1} parent=5 // pred_check
      _
    $region10: #{_lambda_.1} parent=5 // pred_check_branch
      %108 = sbr.rel (%p105) target = $region12
    $region11: #{_lambda_.1} parent=5 // pred_region
      %s109 = ssub.s32 %s8, 1
      // Predicated region
      $region13: #{_lambda_.1} parent=11 // pred_check
        %p110 = pneg %p67
      $region14: #{_lambda_.1} parent=11 // pred_check_branch
        %112 = sbr.rel (%p110) target = $region16
      $region15: #{_lambda_.1} parent=11 // pred_region
        _
      $region16: #{_lambda_.1} parent=11 // pred_fallthru
        _
    $region12: #{_lambda_.1} parent=5 // pred_fallthru
      _
    %p113 = scmp.lt.s32.totalorder %s8, 2
    // Predicated region
    $region17: #{_lambda_.1} parent=5 // pred_check
      %p114 = pneg %p113
    $region18: #{_lambda_.1} parent=5 // pred_check_branch
      %116 = sbr.rel (%p114) target = $region20
    $region19: #{_lambda_.1} parent=5 // pred_region
      // Predicated region
      $region21: #{_lambda_.1} parent=19 // pred_check
        %p117 = pneg %p40
      $region22: #{_lambda_.1} parent=19 // pred_check_branch
        %119 = sbr.rel (%p117) target = $region24
      $region23: #{_lambda_.1} parent=19 // pred_region
        %p120 = scmp.lt.s32.totalorder %s15, 1
        %s121 = scalar_select %p120, %s15, 1
        %s122 = smul.addr %s121, 2
        %s123 = smul.addr %s122, 8
        %s124 = scalar_lea.vmem %s0, %s123
      $region24: #{_lambda_.1} parent=19 // pred_fallthru
        _
    $region20: #{_lambda_.1} parent=5 // pred_fallthru
      _
    %p125 = scmp.le.s32.totalorder 1, %s8
    %p126 = scmp.lt.s32.totalorder %s8, 3
    %p127 = pnand %p125, %p126
    %p128 = pneg %p127
    // Predicated region
    $region25: #{_lambda_.1} parent=5 // pred_check
      _
    $region26: #{_lambda_.1} parent=5 // pred_check_branch
      %130 = sbr.rel (%p127) target = $region28
    $region27: #{_lambda_.1} parent=5 // pred_region
      %s131 = ssub.s32 %s8, 1
      %p132 = scmp.lt.s32.totalorder %s17, 1
      %s133 = scalar_select %p132, %s17, 1
      %s134 = smul.addr %s133, 2
      %s135 = smul.addr %s134, 8
      %s136 = scalar_lea.vmem %s0, %s135
      %p137 = pneg %p46
      %p138 = pneg %p43
      %p139 = pneg %p67
      %p140 = pneg %p64
      %p141 = pneg %p95
      %p142 = pneg %p92
      %s143 = smul.u32 2, %s18
      %p144 = scmp.lt.s32.totalorder %s17, 1
      %s145 = scalar_select %p144, %s17, 1
      %p146 = scmp.lt.s32.totalorder %s143, 1
      %s147 = scalar_select %p146, %s143, 1
      %s148 = smul.addr %s145, 4
      %s149 = sadd.s32 %s147, %s148
      %s150 = smul.addr %s149, 8
      %s151 = scalar_lea.vmem %s2, %s150
      %p152 = scmp.lt.s32.totalorder %s17, 1
      %s153 = scalar_select %p152, %s17, 1
      %s154 = smul.addr %s153, 2
      %s155 = smul.addr %s154, 8
      %s156 = scalar_lea.vmem %s0, %s155
      %s157 = smul.u32 2, %s18
      %p158 = scmp.lt.s32.totalorder %s17, 1
      %s159 = scalar_select %p158, %s17, 1
      %p160 = scmp.lt.s32.totalorder %s157, 1
      %s161 = scalar_select %p160, %s157, 1
      %s162 = smul.addr %s159, 4
      %s163 = sadd.s32 %s161, %s162
      %s164 = smul.addr %s163, 8
      %s165 = scalar_lea.vmem %s2, %s164
      %s166 = smul.u32 2, %s18
      %v168 = vlaneseq
      %v169 = vand.u32 %v168, 127
      %v170 = vadd.s32 %v169, 128
      %s171 = smul.u32 %s18, 256
      %v172 = vstv %s171
      %v173 = vadd.s32 %v169, %v172
      %v174 = vadd.s32 %v170, %v172
      %v175 = vshra.s32 %v173, 4
      %v176 = vshra.s32 %v174, 4
      %v177 = vand.u32 %v173, 15
      %v178 = vand.u32 %v174, 15
      %v179 = vcvt.s32.f32 %v177
      %v180 = vcvt.s32.f32 %v178
      %v181 = vmul.f32 %v179, 0.0625
      %v182 = vmul.f32 %v180, 0.0625
      %v183 = vadd.f32 %v181, -0.46875
      %v184 = vadd.f32 %v182, -0.46875
      %v185 = vcvt.s32.f32 %v175
      %v186 = vcvt.s32.f32 %v176
      %v187 = vmul.f32 %v185, 0.0625
      %v188 = vmul.f32 %v186, 0.0625
      %v189 = vadd.f32 %v187, -0.46875
      %v190 = vadd.f32 %v188, -0.46875
      %v191 = vld [vmem:[%s156] sm:$0xff]
      %v192 = vld [vmem:[%s156 + $0x8] sm:$0xff]
      %194 = vset.pattern.permute.xlu0 0
      %195 = vperm.xlu0 %194, %v191
      %v196 = vpop.permute.xlu0 %195
      %199 = vset.pattern.permute.xlu0 0
      %200 = vperm.xlu0 %199, %v192
      %v201 = vpop.permute.xlu0 %200
      %v203 = vmul.f32 %v196, %v183
      %v204 = vmul.f32 %v196, %v184
      %v205 = vmul.f32 %v201, %v183
      %v206 = vmul.f32 %v201, %v184
      %207 = vset.pattern.permute.xlu0 1
      %208 = vperm.xlu0 %207, %v191
      %v209 = vpop.permute.xlu0 %208
      %211 = vset.pattern.permute.xlu0 1
      %212 = vperm.xlu0 %211, %v192
      %v213 = vpop.permute.xlu0 %212
      %v215 = vmul.f32 %v209, %v189
      %v216 = vmul.f32 %v209, %v190
      %v217 = vmul.f32 %v213, %v189
      %v218 = vmul.f32 %v213, %v190
      %v219 = vadd.f32 %v203, %v215
      %v220 = vadd.f32 %v204, %v216
      %v221 = vadd.f32 %v205, %v217
      %v222 = vadd.f32 %v206, %v218
      %223 = vset.pattern.permute.xlu0 2
      %224 = vperm.xlu0 %223, %v191
      %v225 = vpop.permute.xlu0 %224
      %227 = vset.pattern.permute.xlu0 2
      %228 = vperm.xlu0 %227, %v192
      %v229 = vpop.permute.xlu0 %228
      %v231 = vadd.f32 %v219, %v225
      %v232 = vadd.f32 %v220, %v225
      %v233 = vadd.f32 %v221, %v229
      %v234 = vadd.f32 %v222, %v229
      %v235 = vand.u32 2147483647, %v231
      %vm236 = vcmp.le.f32.partialorder %v235, 0.7853982
      %vm237 = vcmp.lt.s32.totalorder %v231, 0
      %v238 = vand.u32 %v231, 2139095040
      %v239 = vshrl.u32 %v238, 23
      %v240 = vsub.s32 %v239, 127
      %v241 = vand.u32 2147483647, %v231
      %v242 = vand.u32 %v241, 8388607
      %v243 = vor.u32 %v242, 8388608
      %v244 = vsub.s32 0, %v243
      %v245 = vadd.s32 %v240, 1
      %vm246 = vcmp.gt.s32.totalorder %v245, 0
      %v247 = vsel %vm246, %v245, 0
      %v248 = vshrl.u32 %v247, 5
      %v249 = vand.u32 %v247, 31
      %v250 = vsub.s32 32, %v249
      %v251 = vshrl.u32 683565275, %v250
      %v252 = vshll.u32 683565275, %v249
      %v253 = vshrl.u32 2475754826, %v250
      %v254 = vor.u32 %v252, %v253
      %v255 = vshll.u32 2475754826, %v249
      %v256 = vshrl.u32 2131351028, %v250
      %v257 = vor.u32 %v255, %v256
      %v258 = vshll.u32 2131351028, %v249
      %v259 = vshrl.u32 2102212464, %v250
      %v260 = vor.u32 %v258, %v259
      %v261 = vshll.u32 2102212464, %v249
      %v262 = vshrl.u32 920167782, %v250
      %v263 = vor.u32 %v261, %v262
      %v264 = vshll.u32 920167782, %v249
      %v265 = vshrl.u32 1326507024, %v250
      %v266 = vor.u32 %v264, %v265
      %vm267 = vcmp.lt.s32.totalorder %v248, 1
      %vm268 = vcmp.lt.s32.totalorder %v248, 2
      %vm269 = vcmp.lt.s32.totalorder %v248, 3
      %vm270 = vcmp.lt.s32.totalorder %v248, 4
      %v271 = vsel %vm267, %v251, %v254
      %v272 = vsel %vm270, %v260, 2102212464
      %v273 = vsel %vm269, %v257, %v272
      %v274 = vsel %vm268, %v271, %v273
      %v275 = vsel %vm267, %v254, %v257
      %v276 = vsel %vm270, %v263, 920167782
      %v277 = vsel %vm269, %v260, %v276
      %v278 = vsel %vm268, %v275, %v277
      %v279 = vsel %vm267, %v257, %v260
      %v280 = vsel %vm270, %v266, 1326507024
      %v281 = vsel %vm269, %v263, %v280
      %v282 = vsel %vm268, %v279, %v281
      %v283 = vshll.u32 %v243, 8
      %v284 = vmul.u32.u64.compose %v283, %v282
      %v285 = vextract.low.u32 %v284
      %v286 = vextract.high.u32 %v284
      %v287 = vmul.u32.u64.compose %v283, %v278
      %v288 = vextract.low.u32 %v287
      %v289 = vextract.high.u32 %v287
      %v290 = vmul.u32 %v283, %v274
      %v291 = vadd.s32 %v286, %v288
      %vm292 = vc.u32 %v286, %v288
      %v293 = vadd.s32 %v289, 1
      %v294 = vsel %vm292, %v293, %v289
      %v295 = vadd.s32 %v290, %v294
      %v296 = vadd.s32 %v295, 536870912
      %v297 = vshrl.u32 %v296, 30
      %v298 = vshll.u32 %v297, 30
      %v299 = vsub.s32 %v295, %v298
      %vm300 = vcmp.lt.s32.totalorder %v299, 0
      %v301 = vsub.s32 0, %v299
      %v302 = vsel %vm300, %v301, %v299
      %v303 = vclz %v302
      %v304 = vsub.s32 %v303, 2
      %vm305 = vcmp.gt.s32.totalorder 0, %v304
      %v306 = vsel %vm305, 0, %v304
      %v307 = vsub.s32 32, %v306
      %v308 = vshll.u32 %v299, %v306
      %v309 = vshrl.u32 %v291, %v307
      %v310 = vor.u32 %v308, %v309
      %v311 = vsub.s32 4294967266, %v306
      %v312 = vadd.s32 %v311, 127
      %v313 = vshll.u32 %v312, 23
      %v314 = vor.u32 4788187, %v313
      %v315 = vand.u32 2147483647, %v314
      %v317 = vcvt.s32.f32 %v310
      %v318 = vmul.f32 %v317, %v315
      %v319 = vxor.u32 %v318, 2147483648
      %v320 = vsel %vm237, %v319, %v318
      %v321 = vsub.s32 4, %v297
      %v322 = vsel %vm237, %v321, %v297
      %v323 = vsel %vm236, %v231, %v320
      %v324 = vsel %vm236, 0, %v322
      %v325 = vcosq.f32.pop %v323
      %v326 = vsinq.f32.pop %v323
      %vm327 = vweird.f32 %v231
      %v328 = vadd.s32 %v324, 3
      %v329 = vand.u32 %v328, 3
      %vm330 = vcmp.lt.s32.totalorder %v329, 2
      %vm331 = vcmp.eq.s32.totalorder %v329, 0
      %v332 = vxor.u32 %v326, 2147483648
      %v333 = vsel %vm331, %v325, %v332
      %vm334 = vcmp.eq.s32.totalorder %v329, 2
      %v335 = vxor.u32 %v325, 2147483648
      %v336 = vsel %vm334, %v335, %v326
      %v337 = vsel %vm330, %v333, %v336
      %v338 = vsel %vm327, nan, %v337
      %v339 = vand.u32 2147483647, %v232
      %vm340 = vcmp.le.f32.partialorder %v339, 0.7853982
      %vm341 = vcmp.lt.s32.totalorder %v232, 0
      %v342 = vand.u32 %v232, 2139095040
      %v343 = vshrl.u32 %v342, 23
      %v344 = vsub.s32 %v343, 127
      %v345 = vand.u32 2147483647, %v232
      %v346 = vand.u32 %v345, 8388607
      %v347 = vor.u32 %v346, 8388608
      %v348 = vsub.s32 0, %v347
      %v349 = vadd.s32 %v344, 1
      %vm350 = vcmp.gt.s32.totalorder %v349, 0
      %v351 = vsel %vm350, %v349, 0
      %v352 = vshrl.u32 %v351, 5
      %v353 = vand.u32 %v351, 31
      %v354 = vsub.s32 32, %v353
      %v355 = vshrl.u32 683565275, %v354
      %v356 = vshll.u32 683565275, %v353
      %v357 = vshrl.u32 2475754826, %v354
      %v358 = vor.u32 %v356, %v357
      %v359 = vshll.u32 2475754826, %v353
      %v360 = vshrl.u32 2131351028, %v354
      %v361 = vor.u32 %v359, %v360
      %v362 = vshll.u32 2131351028, %v353
      %v363 = vshrl.u32 2102212464, %v354
      %v364 = vor.u32 %v362, %v363
      %v365 = vshll.u32 2102212464, %v353
      %v366 = vshrl.u32 920167782, %v354
      %v367 = vor.u32 %v365, %v366
      %v368 = vshll.u32 920167782, %v353
      %v369 = vshrl.u32 1326507024, %v354
      %v370 = vor.u32 %v368, %v369
      %vm371 = vcmp.lt.s32.totalorder %v352, 1
      %vm372 = vcmp.lt.s32.totalorder %v352, 2
      %vm373 = vcmp.lt.s32.totalorder %v352, 3
      %vm374 = vcmp.lt.s32.totalorder %v352, 4
      %v375 = vsel %vm371, %v355, %v358
      %v376 = vsel %vm374, %v364, 2102212464
      %v377 = vsel %vm373, %v361, %v376
      %v378 = vsel %vm372, %v375, %v377
      %v379 = vsel %vm371, %v358, %v361
      %v380 = vsel %vm374, %v367, 920167782
      %v381 = vsel %vm373, %v364, %v380
      %v382 = vsel %vm372, %v379, %v381
      %v383 = vsel %vm371, %v361, %v364
      %v384 = vsel %vm374, %v370, 1326507024
      %v385 = vsel %vm373, %v367, %v384
      %v386 = vsel %vm372, %v383, %v385
      %v387 = vshll.u32 %v347, 8
      %v388 = vmul.u32.u64.compose %v387, %v386
      %v389 = vextract.low.u32 %v388
      %v390 = vextract.high.u32 %v388
      %v391 = vmul.u32.u64.compose %v387, %v382
      %v392 = vextract.low.u32 %v391
      %v393 = vextract.high.u32 %v391
      %v394 = vmul.u32 %v387, %v378
      %v395 = vadd.s32 %v390, %v392
      %vm396 = vc.u32 %v390, %v392
      %v397 = vadd.s32 %v393, 1
      %v398 = vsel %vm396, %v397, %v393
      %v399 = vadd.s32 %v394, %v398
      %v400 = vadd.s32 %v399, 536870912
      %v401 = vshrl.u32 %v400, 30
      %v402 = vshll.u32 %v401, 30
      %v403 = vsub.s32 %v399, %v402
      %vm404 = vcmp.lt.s32.totalorder %v403, 0
      %v405 = vsub.s32 0, %v403
      %v406 = vsel %vm404, %v405, %v403
      %v407 = vclz %v406
      %v408 = vsub.s32 %v407, 2
      %vm409 = vcmp.gt.s32.totalorder 0, %v408
      %v410 = vsel %vm409, 0, %v408
      %v411 = vsub.s32 32, %v410
      %v412 = vshll.u32 %v403, %v410
      %v413 = vshrl.u32 %v395, %v411
      %v414 = vor.u32 %v412, %v413
      %v415 = vsub.s32 4294967266, %v410
      %v416 = vadd.s32 %v415, 127
      %v417 = vshll.u32 %v416, 23
      %v418 = vor.u32 4788187, %v417
      %v419 = vand.u32 2147483647, %v418
      %v421 = vcvt.s32.f32 %v414
      %v422 = vmul.f32 %v421, %v419
      %v423 = vxor.u32 %v422, 2147483648
      %v424 = vsel %vm341, %v423, %v422
      %v425 = vsub.s32 4, %v401
      %v426 = vsel %vm341, %v425, %v401
      %v427 = vsel %vm340, %v232, %v424
      %v428 = vsel %vm340, 0, %v426
      %v429 = vcosq.f32.pop %v427
      %v430 = vsinq.f32.pop %v427
      %vm431 = vweird.f32 %v232
      %v432 = vadd.s32 %v428, 3
      %v433 = vand.u32 %v432, 3
      %vm434 = vcmp.lt.s32.totalorder %v433, 2
      %vm435 = vcmp.eq.s32.totalorder %v433, 0
      %v436 = vxor.u32 %v430, 2147483648
      %v437 = vsel %vm435, %v429, %v436
      %vm438 = vcmp.eq.s32.totalorder %v433, 2
      %v439 = vxor.u32 %v429, 2147483648
      %v440 = vsel %vm438, %v439, %v430
      %v441 = vsel %vm434, %v437, %v440
      %v442 = vsel %vm431, nan, %v441
      %v443 = vand.u32 2147483647, %v233
      %vm444 = vcmp.le.f32.partialorder %v443, 0.7853982
      %vm445 = vcmp.lt.s32.totalorder %v233, 0
      %v446 = vand.u32 %v233, 2139095040
      %v447 = vshrl.u32 %v446, 23
      %v448 = vsub.s32 %v447, 127
      %v449 = vand.u32 2147483647, %v233
      %v450 = vand.u32 %v449, 8388607
      %v451 = vor.u32 %v450, 8388608
      %v452 = vsub.s32 0, %v451
      %v453 = vadd.s32 %v448, 1
      %vm454 = vcmp.gt.s32.totalorder %v453, 0
      %v455 = vsel %vm454, %v453, 0
      %v456 = vshrl.u32 %v455, 5
      %v457 = vand.u32 %v455, 31
      %v458 = vsub.s32 32, %v457
      %v459 = vshrl.u32 683565275, %v458
      %v460 = vshll.u32 683565275, %v457
      %v461 = vshrl.u32 2475754826, %v458
      %v462 = vor.u32 %v460, %v461
      %v463 = vshll.u32 2475754826, %v457
      %v464 = vshrl.u32 2131351028, %v458
      %v465 = vor.u32 %v463, %v464
      %v466 = vshll.u32 2131351028, %v457
      %v467 = vshrl.u32 2102212464, %v458
      %v468 = vor.u32 %v466, %v467
      %v469 = vshll.u32 2102212464, %v457
      %v470 = vshrl.u32 920167782, %v458
      %v471 = vor.u32 %v469, %v470
      %v472 = vshll.u32 920167782, %v457
      %v473 = vshrl.u32 1326507024, %v458
      %v474 = vor.u32 %v472, %v473
      %vm475 = vcmp.lt.s32.totalorder %v456, 1
      %vm476 = vcmp.lt.s32.totalorder %v456, 2
      %vm477 = vcmp.lt.s32.totalorder %v456, 3
      %vm478 = vcmp.lt.s32.totalorder %v456, 4
      %v479 = vsel %vm475, %v459, %v462
      %v480 = vsel %vm478, %v468, 2102212464
      %v481 = vsel %vm477, %v465, %v480
      %v482 = vsel %vm476, %v479, %v481
      %v483 = vsel %vm475, %v462, %v465
      %v484 = vsel %vm478, %v471, 920167782
      %v485 = vsel %vm477, %v468, %v484
      %v486 = vsel %vm476, %v483, %v485
      %v487 = vsel %vm475, %v465, %v468
      %v488 = vsel %vm478, %v474, 1326507024
      %v489 = vsel %vm477, %v471, %v488
      %v490 = vsel %vm476, %v487, %v489
      %v491 = vshll.u32 %v451, 8
      %v492 = vmul.u32.u64.compose %v491, %v490
      %v493 = vextract.low.u32 %v492
      %v494 = vextract.high.u32 %v492
      %v495 = vmul.u32.u64.compose %v491, %v486
      %v496 = vextract.low.u32 %v495
      %v497 = vextract.high.u32 %v495
      %v498 = vmul.u32 %v491, %v482
      %v499 = vadd.s32 %v494, %v496
      %vm500 = vc.u32 %v494, %v496
      %v501 = vadd.s32 %v497, 1
      %v502 = vsel %vm500, %v501, %v497
      %v503 = vadd.s32 %v498, %v502
      %v504 = vadd.s32 %v503, 536870912
      %v505 = vshrl.u32 %v504, 30
      %v506 = vshll.u32 %v505, 30
      %v507 = vsub.s32 %v503, %v506
      %vm508 = vcmp.lt.s32.totalorder %v507, 0
      %v509 = vsub.s32 0, %v507
      %v510 = vsel %vm508, %v509, %v507
      %v511 = vclz %v510
      %v512 = vsub.s32 %v511, 2
      %vm513 = vcmp.gt.s32.totalorder 0, %v512
      %v514 = vsel %vm513, 0, %v512
      %v515 = vsub.s32 32, %v514
      %v516 = vshll.u32 %v507, %v514
      %v517 = vshrl.u32 %v499, %v515
      %v518 = vor.u32 %v516, %v517
      %v519 = vsub.s32 4294967266, %v514
      %v520 = vadd.s32 %v519, 127
      %v521 = vshll.u32 %v520, 23
      %v522 = vor.u32 4788187, %v521
      %v523 = vand.u32 2147483647, %v522
      %v525 = vcvt.s32.f32 %v518
      %v526 = vmul.f32 %v525, %v523
      %v527 = vxor.u32 %v526, 2147483648
      %v528 = vsel %vm445, %v527, %v526
      %v529 = vsub.s32 4, %v505
      %v530 = vsel %vm445, %v529, %v505
      %v531 = vsel %vm444, %v233, %v528
      %v532 = vsel %vm444, 0, %v530
      %v533 = vcosq.f32.pop %v531
      %v534 = vsinq.f32.pop %v531
      %vm535 = vweird.f32 %v233
      %v536 = vadd.s32 %v532, 3
      %v537 = vand.u32 %v536, 3
      %vm538 = vcmp.lt.s32.totalorder %v537, 2
      %vm539 = vcmp.eq.s32.totalorder %v537, 0
      %v540 = vxor.u32 %v534, 2147483648
      %v541 = vsel %vm539, %v533, %v540
      %vm542 = vcmp.eq.s32.totalorder %v537, 2
      %v543 = vxor.u32 %v533, 2147483648
      %v544 = vsel %vm542, %v543, %v534
      %v545 = vsel %vm538, %v541, %v544
      %v546 = vsel %vm535, nan, %v545
      %v547 = vand.u32 2147483647, %v234
      %vm548 = vcmp.le.f32.partialorder %v547, 0.7853982
      %vm549 = vcmp.lt.s32.totalorder %v234, 0
      %v550 = vand.u32 %v234, 2139095040
      %v551 = vshrl.u32 %v550, 23
      %v552 = vsub.s32 %v551, 127
      %v553 = vand.u32 2147483647, %v234
      %v554 = vand.u32 %v553, 8388607
      %v555 = vor.u32 %v554, 8388608
      %v556 = vsub.s32 0, %v555
      %v557 = vadd.s32 %v552, 1
      %vm558 = vcmp.gt.s32.totalorder %v557, 0
      %v559 = vsel %vm558, %v557, 0
      %v560 = vshrl.u32 %v559, 5
      %v561 = vand.u32 %v559, 31
      %v562 = vsub.s32 32, %v561
      %v563 = vshrl.u32 683565275, %v562
      %v564 = vshll.u32 683565275, %v561
      %v565 = vshrl.u32 2475754826, %v562
      %v566 = vor.u32 %v564, %v565
      %v567 = vshll.u32 2475754826, %v561
      %v568 = vshrl.u32 2131351028, %v562
      %v569 = vor.u32 %v567, %v568
      %v570 = vshll.u32 2131351028, %v561
      %v571 = vshrl.u32 2102212464, %v562
      %v572 = vor.u32 %v570, %v571
      %v573 = vshll.u32 2102212464, %v561
      %v574 = vshrl.u32 920167782, %v562
      %v575 = vor.u32 %v573, %v574
      %v576 = vshll.u32 920167782, %v561
      %v577 = vshrl.u32 1326507024, %v562
      %v578 = vor.u32 %v576, %v577
      %vm579 = vcmp.lt.s32.totalorder %v560, 1
      %vm580 = vcmp.lt.s32.totalorder %v560, 2
      %vm581 = vcmp.lt.s32.totalorder %v560, 3
      %vm582 = vcmp.lt.s32.totalorder %v560, 4
      %v583 = vsel %vm579, %v563, %v566
      %v584 = vsel %vm582, %v572, 2102212464
      %v585 = vsel %vm581, %v569, %v584
      %v586 = vsel %vm580, %v583, %v585
      %v587 = vsel %vm579, %v566, %v569
      %v588 = vsel %vm582, %v575, 920167782
      %v589 = vsel %vm581, %v572, %v588
      %v590 = vsel %vm580, %v587, %v589
      %v591 = vsel %vm579, %v569, %v572
      %v592 = vsel %vm582, %v578, 1326507024
      %v593 = vsel %vm581, %v575, %v592
      %v594 = vsel %vm580, %v591, %v593
      %v595 = vshll.u32 %v555, 8
      %v596 = vmul.u32.u64.compose %v595, %v594
      %v597 = vextract.low.u32 %v596
      %v598 = vextract.high.u32 %v596
      %v599 = vmul.u32.u64.compose %v595, %v590
      %v600 = vextract.low.u32 %v599
      %v601 = vextract.high.u32 %v599
      %v602 = vmul.u32 %v595, %v586
      %v603 = vadd.s32 %v598, %v600
      %vm604 = vc.u32 %v598, %v600
      %v605 = vadd.s32 %v601, 1
      %v606 = vsel %vm604, %v605, %v601
      %v607 = vadd.s32 %v602, %v606
      %v608 = vadd.s32 %v607, 536870912
      %v609 = vshrl.u32 %v608, 30
      %v610 = vshll.u32 %v609, 30
      %v611 = vsub.s32 %v607, %v610
      %vm612 = vcmp.lt.s32.totalorder %v611, 0
      %v613 = vsub.s32 0, %v611
      %v614 = vsel %vm612, %v613, %v611
      %v615 = vclz %v614
      %v616 = vsub.s32 %v615, 2
      %vm617 = vcmp.gt.s32.totalorder 0, %v616
      %v618 = vsel %vm617, 0, %v616
      %v619 = vsub.s32 32, %v618
      %v620 = vshll.u32 %v611, %v618
      %v621 = vshrl.u32 %v603, %v619
      %v622 = vor.u32 %v620, %v621
      %v623 = vsub.s32 4294967266, %v618
      %v624 = vadd.s32 %v623, 127
      %v625 = vshll.u32 %v624, 23
      %v626 = vor.u32 4788187, %v625
      %v627 = vand.u32 2147483647, %v626
      %v629 = vcvt.s32.f32 %v622
      %v630 = vmul.f32 %v629, %v627
      %v631 = vxor.u32 %v630, 2147483648
      %v632 = vsel %vm549, %v631, %v630
      %v633 = vsub.s32 4, %v609
      %v634 = vsel %vm549, %v633, %v609
      %v635 = vsel %vm548, %v234, %v632
      %v636 = vsel %vm548, 0, %v634
      %v637 = vcosq.f32.pop %v635
      %v638 = vsinq.f32.pop %v635
      %vm639 = vweird.f32 %v234
      %v640 = vadd.s32 %v636, 3
      %v641 = vand.u32 %v640, 3
      %vm642 = vcmp.lt.s32.totalorder %v641, 2
      %vm643 = vcmp.eq.s32.totalorder %v641, 0
      %v644 = vxor.u32 %v638, 2147483648
      %v645 = vsel %vm643, %v637, %v644
      %vm646 = vcmp.eq.s32.totalorder %v641, 2
      %v647 = vxor.u32 %v637, 2147483648
      %v648 = vsel %vm646, %v647, %v638
      %v649 = vsel %vm642, %v645, %v648
      %v650 = vsel %vm639, nan, %v649
      %651 = vset.pattern.permute.xlu0 3
      %652 = vperm.xlu0 %651, %v191
      %v653 = vpop.permute.xlu0 %652
      %655 = vset.pattern.permute.xlu0 3
      %656 = vperm.xlu0 %655, %v192
      %v657 = vpop.permute.xlu0 %656
      %v659 = vmul.f32 %v338, %v653
      %v660 = vmul.f32 %v442, %v653
      %v661 = vmul.f32 %v546, %v657
      %v662 = vmul.f32 %v650, %v657
      %v663 = vld [vmem:[%s1] sm:$0xf]
      %v664 = vld [vmem:[%s1 + $0x4] sm:$0xf]
      %v665 = vpack.c.bf16 %v661, %v659
      %v666 = vpack.c.bf16 %v662, %v660
      %v669 = vunpack.c.l.b16 %v663
      %v670 = vunpack.c.l.b16 %v664
      %v671 = vpack.c.b16 %v670, %v669
      %vm672 = vcmask 130048
      %v674 = vsel %vm672, %v671, 0
      %676 = vmatprep.subr.bf16.mxu0 %v666
      %677 = vmatpush1.bf16.msra.mxu0 %v665
      %678 = vmatprep.subr.bf16.mxu0 0
      %679 = vmatpush1.bf16.msra.mxu0 0
      %680 = vmatprep.subr.bf16.mxu0 0
      %681 = vmatpush1.bf16.msra.mxu0 0
      %682 = vmatprep.subr.bf16.mxu0 0
      %683 = vmatpush1.bf16.msra.mxu0 0
      %684 = vmatprep.subr.bf16.mxu0 0
      %685 = vmatpush1.bf16.msra.mxu0 0
      %686 = vmatprep.subr.bf16.mxu0 0
      %687 = vmatpush1.bf16.msra.mxu0 0
      %688 = vmatprep.subr.bf16.mxu0 0
      %689 = vmatpush1.bf16.msra.mxu0 0
      %690 = vmatprep.subr.bf16.mxu0 0
      %691 = vmatpush1.bf16.msra.mxu0 0
      %692 = vmatprep.subr.bf16.mxu0 0
      %693 = vmatpush1.bf16.msra.mxu0 0
      %694 = vmatprep.subr.bf16.mxu0 0
      %695 = vmatpush1.bf16.msra.mxu0 0
      %696 = vmatprep.subr.bf16.mxu0 0
      %697 = vmatpush1.bf16.msra.mxu0 0
      %698 = vmatprep.subr.bf16.mxu0 0
      %699 = vmatpush1.bf16.msra.mxu0 0
      %700 = vmatprep.subr.bf16.mxu0 0
      %701 = vmatpush1.bf16.msra.mxu0 0
      %702 = vmatprep.subr.bf16.mxu0 0
      %703 = vmatpush1.bf16.msra.mxu0 0
      %704 = vmatprep.subr.bf16.mxu0 0
      %705 = vmatpush1.bf16.msra.mxu0 0
      %706 = vmatprep.subr.bf16.mxu0 0
      %707 = vmatpush1.bf16.msra.mxu0 0
      %708 = vmatprep.mubr.bf16.mxu0 0
      %709 = vmatmul.mubr.bf16.gmra.mrb[0].mxu0 %v674
      %v710 = vpop.f32.mrb[0].mxu0
      %v711 = vadd.f32 0.0, %v710
      %v712 = vpop.f32.mrb[0].mxu0
      %v713 = vadd.f32 0.0, %v712
      %v714 = vpop.f32.mrb[0].mxu0
      %v715 = vadd.f32 0.0, %v714
      %v716 = vpop.f32.mrb[0].mxu0
      %v717 = vadd.f32 0.0, %v716
      %718 = vdwg.mxu0
      %719 = vst [vmem:[%s165] sm:$0xff] %v711
      %720 = vst [vmem:[%s165 + $0x8] sm:$0xff] %v713
      %721 = vst [vmem:[%s165 + $0x10] sm:$0xff] %v715
      %722 = vst [vmem:[%s165 + $0x18] sm:$0xff] %v717
      %s723 = smul.u32 2, %s18
      %p724 = scmp.lt.s32.totalorder %s17, 1
      %s725 = scalar_select %p724, %s17, 1
      %p726 = scmp.lt.s32.totalorder %s723, 1
      %s727 = scalar_select %p726, %s723, 1
      %s728 = smul.addr %s725, 4
      %s729 = sadd.s32 %s727, %s728
      %s730 = smul.addr %s729, 8
      %s731 = scalar_lea.vmem %s2, %s730
      // Predicated region
      $region29: #{_lambda_.1} parent=27 // pred_check
        %p732 = pneg %p92
      $region30: #{_lambda_.1} parent=27 // pred_check_branch
        %734 = sbr.rel (%p732) target = $region32
      $region31: #{_lambda_.1} parent=27 // pred_region
        %s735 = smul.u32 2, %s18
      $region32: #{_lambda_.1} parent=27 // pred_fallthru
        _
    $region28: #{_lambda_.1} parent=5 // pred_fallthru
      _
    %p736 = scmp.le.s32.totalorder 2, %s8
    // Predicated region
    $region33: #{_lambda_.1} parent=5 // pred_check
      %p737 = pneg %p736
    $region34: #{_lambda_.1} parent=5 // pred_check_branch
      %739 = sbr.rel (%p737) target = $region36
    $region35: #{_lambda_.1} parent=5 // pred_region
      %s740 = ssub.s32 %s8, 2
      // Predicated region
      $region37: #{_lambda_.1} parent=35 // pred_check
        %p741 = pneg %p98
      $region38: #{_lambda_.1} parent=35 // pred_check_branch
        %743 = sbr.rel (%p741) target = $region40
      $region39: #{_lambda_.1} parent=35 // pred_region
        %s744 = smul.u32 2, %s20
        %p745 = scmp.lt.s32.totalorder %s19, 1
        %s746 = scalar_select %p745, %s19, 1
        %p747 = scmp.lt.s32.totalorder %s744, 1
        %s748 = scalar_select %p747, %s744, 1
        %s749 = smul.addr %s746, 4
        %s750 = sadd.s32 %s748, %s749
        %s751 = smul.addr %s750, 8
        %s752 = scalar_lea.vmem %s2, %s751
      $region40: #{_lambda_.1} parent=35 // pred_fallthru
        _
    $region36: #{_lambda_.1} parent=5 // pred_fallthru
      _
  $region6: #{_lambda_.1} parent=0 // loop_footer
    %s12 = sadd.s32 1, %s8
  $region7: #{_lambda_.1} parent=0 // loop_footer_branch
    %7 = sbr.rel target = $region3
  $region8: #{_lambda_.1} parent=0 // loop_exit
    _

</llo_original>
